<compile_context>
chip_gen: v7x
topology: tpu7x:2x2x1
jax: 0.10.0
libtpu: 0.0.40
codegen_flags: <defaults>
</compile_context>

<pallas_src>
import math

import jax
import jax.numpy as jnp
from jax.experimental import pallas as pl
from jax.experimental.pallas import tpu as pltpu

OUT_DIM = 2      # nn.Linear(hidden_dim, 2)
OUT_PAD = 128    # lane-aligned padded weight width (kept at 128; see review)


def _round_up(x, m):
    return (x + m - 1) // m * m


def _no_coref_kernel(x_ref, w_ref, b_ref, o_ref):
    """One grid step == one tile of M rows.

    x_ref : (TM, H)        input rows, native dtype (cast in-kernel if needed)
    w_ref : (H, OUT_PAD)   packed weight (transposed; cols >= OUT_DIM are zero)
    b_ref : (1, OUT_DIM)   bias (f32)
    o_ref : (TM, OUT_DIM)  logits (f32)
    """
    x = x_ref[...]
    if x.dtype != w_ref.dtype:
        # In-kernel cast on the VMEM tile (free under VPU slack); avoids a
        # separate wrapper-side XLA cast that would re-stream all of x in HBM.
        x = x.astype(w_ref.dtype)
    acc = jnp.dot(x, w_ref[...], preferred_element_type=jnp.float32)
    o_ref[...] = (acc[:, :OUT_DIM] + b_ref[...]).astype(o_ref.dtype)


def pack_params(w, b, compute_dtype=jnp.float32):
    """Pack PyTorch-convention Linear params once (hoisted out of per-call path).

    w: (OUT_DIM, H)  PyTorch nn.Linear weight (out, in)
    b: (OUT_DIM,)    bias
    Returns (w_pad, b_row): (H, OUT_PAD) in compute_dtype, (1, OUT_DIM) f32.
    Padding columns are zero, so padded accumulator lanes are exactly zero.
    """
    H = w.shape[1]
    w_pad = jnp.zeros((H, OUT_PAD), compute_dtype)
    w_pad = w_pad.at[:, :OUT_DIM].set(w.T.astype(compute_dtype))
    b_row = b.astype(jnp.float32).reshape(1, OUT_DIM)
    return w_pad, b_row


def _pick_tile_m(M, H, x_itemsize, max_tile_m, x_budget_bytes):
    """Biggest multiple-of-8 tile whose double-buffered x fits the VMEM budget."""
    tm = x_budget_bytes // (2 * H * x_itemsize)
    tm = max(8, min((int(tm) // 8) * 8, max_tile_m))
    tm = min(tm, _round_up(M, 8))           # don't exceed what M needs
    if M < 8:
        return M                            # block == full extent, no partial block
    if M >= 16:
        # Guarantee >= 2 grid steps so both v7x TensorCores get work
        # ("parallel" axis); costs nothing on single-TC v5e/v6e.
        tm = min(tm, _round_up(pl.cdiv(M, 2), 8))
    return max(tm, 8)


_SINGLE_BUFFER_PARAMS = True  # flipped off if pl.Buffered(1) is rejected


def no_coref_head(no_coref_vector, w_pad, b_row, *,
                  max_tile_m=1024, x_vmem_budget_bytes=24 * 1024 * 1024):
    """Pallas implementation of NoCorefHead.forward.

    no_coref_vector: (..., H) — leading dims folded into M (metadata-only
                     reshape; no pad, no wrapper-side cast).
    w_pad, b_row   : output of pack_params.
    Returns (..., OUT_DIM) logits in float32.
    """
    global _SINGLE_BUFFER_PARAMS

    H = w_pad.shape[0]
    lead = no_coref_vector.shape[:-1]
    assert no_coref_vector.shape[-1] == H

    M = math.prod(lead) if lead else 1
    x2 = no_coref_vector.reshape(M, H)

    x_bytes = jnp.dtype(x2.dtype).itemsize
    w_bytes = jnp.dtype(w_pad.dtype).itemsize
    tm = _pick_tile_m(M, H, x_bytes, max_tile_m, x_vmem_budget_bytes)
    grid = (pl.cdiv(M, tm),)

    # VMEM estimate: double-buffered x + (worst-case double-buffered) weight +
    # bias + lane-padded output buffers; headroom, capped under v7x's 64 MiB.
    vmem_needed = (2 * tm * H * x_bytes
                   + 2 * H * OUT_PAD * w_bytes
                   + 2 * 8 * OUT_PAD * 4
                   + 2 * tm * OUT_PAD * 4)
    vmem_limit = min(max(int(vmem_needed * 1.5) + (4 << 20), 32 << 20), 56 << 20)

    cost = pl.CostEstimate(
        flops=2 * M * H * OUT_PAD,
        transcendentals=0,
        bytes_accessed=(M * H * x_bytes + H * OUT_PAD * w_bytes
                        + OUT_DIM * 4 + M * OUT_DIM * 4),
    )

    def run(single_buffer_params):
        pmode = ({"pipeline_mode": pl.Buffered(1)}
                 if single_buffer_params else {})
        return pl.pallas_call(
            _no_coref_kernel,
            out_shape=jax.ShapeDtypeStruct((M, OUT_DIM), jnp.float32),
            grid=grid,
            in_specs=[
                pl.BlockSpec((tm, H), lambda i: (i, 0)),                 # x tile
                pl.BlockSpec((H, OUT_PAD), lambda i: (0, 0), **pmode),   # weight
                pl.BlockSpec((1, OUT_DIM), lambda i: (0, 0), **pmode),   # bias
            ],
            out_specs=pl.BlockSpec((tm, OUT_DIM), lambda i: (i, 0)),
            compiler_params=pltpu.CompilerParams(
                dimension_semantics=("parallel",),
                vmem_limit_bytes=vmem_limit),
            cost_estimate=cost,
        )(x2, w_pad, b_row)

    if _SINGLE_BUFFER_PARAMS:
        try:
            out = run(True)
        except Exception:
            # pl.Buffered(1) not supported on this jax build — fall back to
            # default double-buffering (only costs one tiny (H,128) buffer).
            _SINGLE_BUFFER_PARAMS = False
            out = run(False)
    else:
        out = run(False)

    return out.reshape(*lead, OUT_DIM)


def init_params(key, hidden_dim):
    """PyTorch nn.Linear default init: U[-k, k], k = 1/sqrt(fan_in)."""
    k = 1.0 / math.sqrt(hidden_dim)
    kw, kb = jax.random.split(key)
    w = jax.random.uniform(kw, (OUT_DIM, hidden_dim), jnp.float32, -k, k)
    b = jax.random.uniform(kb, (OUT_DIM,), jnp.float32, -k, k)
    return {"w": w, "b": b}


def reference(no_coref_vector, params):
    """Pure-JAX reference matching the PyTorch forward (x @ W.T + b)."""
    return no_coref_vector @ params["w"].T + params["b"]


if __name__ == "__main__":
    key = jax.random.PRNGKey(0)
    k_x1, k_x2, k_p = jax.random.split(key, 3)

    B, S, H = 2, 8, 32
    params = init_params(k_p, H)
    w_f32, b_row = pack_params(params["w"], params["b"], jnp.float32)

    # Case 1: (B, H) input — M=2, single full-extent tile (no padding anywhere).
    x_2d = jax.random.normal(k_x1, (B, H), jnp.float32)
    out_2d = jax.block_until_ready(no_coref_head(x_2d, w_f32, b_row))
    ref_2d = reference(x_2d, params)
    assert out_2d.shape == ref_2d.shape, (out_2d.shape, ref_2d.shape)
    assert jnp.allclose(out_2d, ref_2d, atol=1e-4, rtol=1e-4), \
        float(jnp.abs(out_2d - ref_2d).max())

    # Case 2: (B, S, H) input — M=16 folds into two 8-row tiles ("parallel" axis).
    x_3d = jax.random.normal(k_x2, (B, S, H), jnp.float32)
    out_3d = jax.block_until_ready(no_coref_head(x_3d, w_f32, b_row))
    ref_3d = reference(x_3d, params)
    assert out_3d.shape == ref_3d.shape, (out_3d.shape, ref_3d.shape)
    assert jnp.allclose(out_3d, ref_3d, atol=1e-4, rtol=1e-4), \
        float(jnp.abs(out_3d - ref_3d).max())

    # Case 3: bf16 weights with f32 activations — cast happens in-kernel
    # (no extra wrapper-side HBM pass over x), f32 accumulation; loose tol.
    w_bf16, _ = pack_params(params["w"], params["b"], jnp.bfloat16)
    out_bf16 = jax.block_until_ready(no_coref_head(x_3d, w_bf16, b_row))
    assert out_bf16.shape == ref_3d.shape
    assert jnp.allclose(out_bf16, ref_3d, atol=5e-2, rtol=5e-2), \
        float(jnp.abs(out_bf16 - ref_3d).max())

    # Case 4: bf16 activations + bf16 weights (native low-precision path).
    out_xbf = jax.block_until_ready(
        no_coref_head(x_3d.astype(jnp.bfloat16), w_bf16, b_row))
    assert out_xbf.shape == ref_3d.shape
    assert jnp.allclose(out_xbf, ref_3d, atol=5e-2, rtol=5e-2), \
        float(jnp.abs(out_xbf - ref_3d).max())

    print("KERNEL_OK")
</pallas_src>

<mosaic_0001>
module attributes {stable_mosaic.version = 11 : i64} {
  func.func @_no_coref_kernel(%arg0: i32, %arg1: memref<2x32xf32, #tpu.memory_space<vmem>>, %arg2: memref<32x128xf32, #tpu.memory_space<vmem>>, %arg3: memref<1x2xf32, #tpu.memory_space<vmem>>, %arg4: memref<2x2xf32, #tpu.memory_space<vmem>>) attributes {dimension_semantics = [#tpu.dimension_semantics<parallel>], iteration_bounds = array<i64: 1>, scalar_prefetch = 0 : i64, scratch_operands = 0 : i64, tpu.core_type = #tpu.core_type<tc>, window_params = [{transform_indices = @transform_0, window_bounds = array<i64: 2, 32>}, {pipeline_mode = #tpu.pipeline_mode<synchronous>, transform_indices = @transform_1, window_bounds = array<i64: 32, 128>}, {pipeline_mode = #tpu.pipeline_mode<synchronous>, transform_indices = @transform_2, window_bounds = array<i64: 1, 2>}, {transform_indices = @transform_3, window_bounds = array<i64: 2, 2>}]} {
    %c0 = arith.constant 0 : index
    %c0_0 = arith.constant 0 : index
    %0 = vector.load %arg1[%c0, %c0_0] : memref<2x32xf32, #tpu.memory_space<vmem>>, vector<2x32xf32>
    %c0_1 = arith.constant 0 : index
    %c0_2 = arith.constant 0 : index
    %1 = vector.load %arg2[%c0_1, %c0_2] : memref<32x128xf32, #tpu.memory_space<vmem>>, vector<32x128xf32>
    %cst = arith.constant dense<0.000000e+00> : vector<2x128xf32>
    %2 = tpu.matmul %0, %1, %cst {dimension_numbers = #tpu.dot_dimension_numbers<[1], [0], [0], [1], [0, 0, 1, 1], [], []>} : vector<2x32xf32>, vector<32x128xf32>, vector<2x128xf32> -> vector<2x128xf32>
    %3 = vector.extract_strided_slice %2 {offsets = [0, 0], sizes = [2, 2], strides = [1, 1]} : vector<2x128xf32> to vector<2x2xf32>
    %c0_3 = arith.constant 0 : index
    %c0_4 = arith.constant 0 : index
    %4 = vector.load %arg3[%c0_3, %c0_4] : memref<1x2xf32, #tpu.memory_space<vmem>>, vector<1x2xf32>
    %5 = vector.broadcast %4 : vector<1x2xf32> to vector<2x2xf32>
    %6 = arith.addf %3, %5 : vector<2x2xf32>
    %c0_5 = arith.constant 0 : index
    %c0_6 = arith.constant 0 : index
    %7 = vector.load %arg4[%c0_5, %c0_6] : memref<2x2xf32, #tpu.memory_space<vmem>>, vector<2x2xf32>
    tpu.vector_store %arg4[%c0_5, %c0_6], %6 {strides = array<i32>} : memref<2x2xf32, #tpu.memory_space<vmem>>, vector<2x2xf32>,
    return
  }
  func.func @transform_0(%arg0: i32) -> (i32, i32) {
    %c0_i32 = arith.constant 0 : i32
    %c0_i32_0 = arith.constant 0 : i32
    return %arg0, %c0_i32 : i32, i32
  }
  func.func @transform_1(%arg0: i32) -> (i32, i32) {
    %c0_i32 = arith.constant 0 : i32
    %c0_i32_0 = arith.constant 0 : i32
    %c0_i32_1 = arith.constant 0 : i32
    return %c0_i32, %c0_i32_0 : i32, i32
  }
  func.func @transform_2(%arg0: i32) -> (i32, i32) {
    %c0_i32 = arith.constant 0 : i32
    %c0_i32_0 = arith.constant 0 : i32
    %c0_i32_1 = arith.constant 0 : i32
    return %c0_i32, %c0_i32_0 : i32, i32
  }
  func.func @transform_3(%arg0: i32) -> (i32, i32) {
    %c0_i32 = arith.constant 0 : i32
    %c0_i32_0 = arith.constant 0 : i32
    return %arg0, %c0_i32 : i32, i32
  }
}

module attributes {stable_mosaic.version = 11 : i64} {
  func.func @_no_coref_kernel(%arg0: i32, %arg1: memref<2x32xf32, #tpu.memory_space<vmem>>, %arg2: memref<32x128xf32, #tpu.memory_space<vmem>>, %arg3: memref<1x2xf32, #tpu.memory_space<vmem>>, %arg4: memref<2x2xf32, #tpu.memory_space<vmem>>) attributes {dimension_semantics = [#tpu.dimension_semantics<parallel>], iteration_bounds = array<i64: 1>, scalar_prefetch = 0 : i64, scratch_operands = 0 : i64, tpu.core_type = #tpu.core_type<tc>, window_params = [{transform_indices = @transform_0, window_bounds = array<i64: 2, 32>}, {pipeline_mode = #tpu.pipeline_mode<synchronous>, transform_indices = @transform_1, window_bounds = array<i64: 32, 128>}, {pipeline_mode = #tpu.pipeline_mode<synchronous>, transform_indices = @transform_2, window_bounds = array<i64: 1, 2>}, {transform_indices = @transform_3, window_bounds = array<i64: 2, 2>}]} {
    %c0 = arith.constant 0 : index
    %c0_0 = arith.constant 0 : index
    %0 = vector.load %arg1[%c0, %c0_0] : memref<2x32xf32, #tpu.memory_space<vmem>>, vector<2x32xf32>
    %c0_1 = arith.constant 0 : index
    %c0_2 = arith.constant 0 : index
    %1 = vector.load %arg2[%c0_1, %c0_2] : memref<32x128xf32, #tpu.memory_space<vmem>>, vector<32x128xf32>
    %cst = arith.constant dense<0.000000e+00> : vector<2x128xf32>
    %2 = tpu.matmul %0, %1, %cst {dimension_numbers = #tpu.dot_dimension_numbers<[1], [0], [0], [1], [0, 0, 1, 1], [], []>} : vector<2x32xf32>, vector<32x128xf32>, vector<2x128xf32> -> vector<2x128xf32>
    %3 = vector.extract_strided_slice %2 {offsets = [0, 0], sizes = [2, 2], strides = [1, 1]} : vector<2x128xf32> to vector<2x2xf32>
    %c0_3 = arith.constant 0 : index
    %c0_4 = arith.constant 0 : index
    %4 = vector.load %arg3[%c0_3, %c0_4] : memref<1x2xf32, #tpu.memory_space<vmem>>, vector<1x2xf32>
    %5 = vector.broadcast %4 : vector<1x2xf32> to vector<2x2xf32>
    %6 = arith.addf %3, %5 : vector<2x2xf32>
    %c0_5 = arith.constant 0 : index
    %c0_6 = arith.constant 0 : index
    %7 = vector.load %arg4[%c0_5, %c0_6] : memref<2x2xf32, #tpu.memory_space<vmem>>, vector<2x2xf32>
    tpu.vector_store %arg4[%c0_5, %c0_6], %6 {strides = array<i32>} : memref<2x2xf32, #tpu.memory_space<vmem>>, vector<2x2xf32>,
    return
  }
  func.func @transform_0(%arg0: i32) -> (i32, i32) {
    %c0_i32 = arith.constant 0 : i32
    %c0_i32_0 = arith.constant 0 : i32
    return %arg0, %c0_i32 : i32, i32
  }
  func.func @transform_1(%arg0: i32) -> (i32, i32) {
    %c0_i32 = arith.constant 0 : i32
    %c0_i32_0 = arith.constant 0 : i32
    %c0_i32_1 = arith.constant 0 : i32
    return %c0_i32, %c0_i32_0 : i32, i32
  }
  func.func @transform_2(%arg0: i32) -> (i32, i32) {
    %c0_i32 = arith.constant 0 : i32
    %c0_i32_0 = arith.constant 0 : i32
    %c0_i32_1 = arith.constant 0 : i32
    return %c0_i32, %c0_i32_0 : i32, i32
  }
  func.func @transform_3(%arg0: i32) -> (i32, i32) {
    %c0_i32 = arith.constant 0 : i32
    %c0_i32_0 = arith.constant 0 : i32
    return %arg0, %c0_i32 : i32, i32
  }
}

</mosaic_0001>

<llo_original>
// kernel: tpu_custom_call.1
$region0: #{tpu_custom_call.1}
  #allocation0 [shape = 'u32[]', space=smem, size = 0x4, offset = 0x4, fixed_abs, tag = 'smem constant byte address 0x4 - core index']
  #allocation1 [shape = 'u32[144,128]{1,0:T(1,128)}', space=vmem, size = 0x12000, scoped, tag = 'internal scratch']
  %s0 = inlined_call_operand.hbm [shape: f32[2,32], index: 0, kind: input, shape index: {}]
  %s1 = inlined_call_operand.hbm [shape: f32[32,128], index: 1, kind: input, shape index: {}]
  %s2 = inlined_call_operand.vmem [shape: f32[1,2], index: 2, kind: input, shape index: {}]
  %s3 = inlined_call_operand.hbm [shape: f32[2,2], index: 3, kind: output, shape index: {}]
  %s4 = sld [smem:[#allocation0]]
  $region30: #{tpu_custom_call.1} parent=0
    _
  %s6 = ssub.s32 1, %s4
  %s7 = scalar_select 0, %s6, %s4
  $region1: #{tpu_custom_call.1} parent=0
    #allocation2 [shape = 'u8[1024]{0}', space=vmem, size = 0x400, scoped, tag = 'input window, operand 0, single buffered']
    #allocation3 [shape = 's32[1]{0}', space=sflag, size = 0x4, scoped, tag = 'scoped memory for tpu_custom_call.1']
    #allocation4 [shape = 's32[1]{0}', space=sflag, size = 0x4, scoped, tag = 'scoped memory for tpu_custom_call.1']
    #allocation5 [shape = 'u8[16384]{0}', space=vmem, size = 0x4000, scoped, tag = 'input window, operand 1, single buffered']
    #allocation6 [shape = 's32[1]{0}', space=sflag, size = 0x4, scoped, tag = 'scoped memory for tpu_custom_call.1']
    #allocation7 [shape = 'u8[1024]{0}', space=vmem, size = 0x400, scoped, tag = 'output window, operand 0, single buffered']
    %8 = vsyncpa [#allocation3], 0
    %9 = vsyncpa [#allocation6], 0
    %10 = vsyncpa [#allocation4], 0
    // Predicated region
    $region2: #{tpu_custom_call.1} parent=1 // pred_check
      _
    $region3: #{tpu_custom_call.1} parent=1 // pred_check_branch
      %12 = sbr.rel (0) target = $region5
    $region4: #{tpu_custom_call.1} parent=1 // pred_region
      %s14 = ssub.s32 32, 32
      %15 = vsyncadd [#allocation3], %s14
      %s17 = sshll.u32 [#allocation2], 4
      %s18 = int_to_ptr.vmem [resolvable:$true] %s17
      %20 = dma.hbm_to_vmem [thread:$0]  %s0, 32, %s18, [#allocation3]
    $region5: #{tpu_custom_call.1} parent=1 // pred_fallthru
      _
    // Predicated region
    $region6: #{tpu_custom_call.1} parent=1 // pred_check
      _
    $region7: #{tpu_custom_call.1} parent=1 // pred_check_branch
      %22 = sbr.rel (0) target = $region9
    $region8: #{tpu_custom_call.1} parent=1 // pred_region
      %s24 = ssub.s32 512, 512
      %25 = vsyncadd [#allocation6], %s24
      %s26 = sshll.u32 [#allocation5], 4
      %s27 = int_to_ptr.vmem [resolvable:$true] %s26
      %32 = dma.hbm_to_vmem [thread:$0]  %s1, 512, %s27, [#allocation6], 128, 128, 8
    $region9: #{tpu_custom_call.1} parent=1 // pred_fallthru
      _
    // Predicated region
    $region10: #{tpu_custom_call.1} parent=1 // pred_check
      _
    $region11: #{tpu_custom_call.1} parent=1 // pred_check_branch
      %34 = sbr.rel (0) target = $region13
    $region12: #{tpu_custom_call.1} parent=1 // pred_region
      _
    $region13: #{tpu_custom_call.1} parent=1 // pred_fallthru
      _
    // Predicated region
    $region14: #{tpu_custom_call.1} parent=1 // pred_check
      _
    $region15: #{tpu_custom_call.1} parent=1 // pred_check_branch
      %36 = sbr.rel (0) target = $region17
    $region16: #{tpu_custom_call.1} parent=1 // pred_region
      %37 = dma.done [#allocation3], 32
    $region17: #{tpu_custom_call.1} parent=1 // pred_fallthru
      _
    // Predicated region
    $region18: #{tpu_custom_call.1} parent=1 // pred_check
      _
    $region19: #{tpu_custom_call.1} parent=1 // pred_check_branch
      %39 = sbr.rel (0) target = $region21
    $region20: #{tpu_custom_call.1} parent=1 // pred_region
      %40 = dma.done [#allocation6], 512
    $region21: #{tpu_custom_call.1} parent=1 // pred_fallthru
      _
    %v41 = vld [vmem:[#allocation2] sm:$0x3]
    %v42 = vld [vmem:[#allocation5] sm:$0xff]
    %v43 = vld [vmem:[#allocation5 + $0x8] sm:$0xff]
    %v44 = vld [vmem:[#allocation5 + $0x10] sm:$0xff]
    %v45 = vld [vmem:[#allocation5 + $0x18] sm:$0xff]
    %vm46 = vcmask 261120
    %v48 = vsel %vm46, %v41, 0
    %50 = vmatprep.subr.mxu0 0.0
    %51 = vmatpush1.msra.mxu0 %v42
    %52 = vmatprep.subr.mxu0 0.0
    %53 = vmatpush1.msra.mxu0 %v43
    %54 = vmatprep.subr.mxu0 0.0
    %55 = vmatpush1.msra.mxu0 %v44
    %56 = vmatprep.subr.mxu0 0.0
    %57 = vmatpush1.msra.mxu0 %v45
    %58 = vmatprep.subr.mxu0 0.0
    %59 = vmatpush1.msra.mxu0 0.0
    %60 = vmatprep.subr.mxu0 0.0
    %61 = vmatpush1.msra.mxu0 0.0
    %62 = vmatprep.subr.mxu0 0.0
    %63 = vmatpush1.msra.mxu0 0.0
    %64 = vmatprep.subr.mxu0 0.0
    %65 = vmatpush1.msra.mxu0 0.0
    %66 = vmatprep.subr.mxu0 0.0
    %67 = vmatpush1.msra.mxu0 0.0
    %68 = vmatprep.subr.mxu0 0.0
    %69 = vmatpush1.msra.mxu0 0.0
    %70 = vmatprep.subr.mxu0 0.0
    %71 = vmatpush1.msra.mxu0 0.0
    %72 = vmatprep.subr.mxu0 0.0
    %73 = vmatpush1.msra.mxu0 0.0
    %74 = vmatprep.subr.mxu0 0.0
    %75 = vmatpush1.msra.mxu0 0.0
    %76 = vmatprep.subr.mxu0 0.0
    %77 = vmatpush1.msra.mxu0 0.0
    %78 = vmatprep.subr.mxu0 0.0
    %79 = vmatpush1.msra.mxu0 0.0
    %80 = vmatprep.subr.mxu0 0.0
    %81 = vmatpush1.msra.mxu0 0.0
    %82 = vmatprep.subr.mxu0 0.0
    %83 = vmatpush1.msra.mxu0 0.0
    %84 = vmatprep.subr.mxu0 0.0
    %85 = vmatpush1.msra.mxu0 0.0
    %86 = vmatprep.subr.mxu0 0.0
    %87 = vmatpush1.msra.mxu0 0.0
    %88 = vmatprep.subr.mxu0 0.0
    %89 = vmatpush1.msra.mxu0 0.0
    %90 = vmatprep.subr.mxu0 0.0
    %91 = vmatpush1.msra.mxu0 0.0
    %92 = vmatprep.subr.mxu0 0.0
    %93 = vmatpush1.msra.mxu0 0.0
    %94 = vmatprep.subr.mxu0 0.0
    %95 = vmatpush1.msra.mxu0 0.0
    %96 = vmatprep.subr.mxu0 0.0
    %97 = vmatpush1.msra.mxu0 0.0
    %98 = vmatprep.subr.mxu0 0.0
    %99 = vmatpush1.msra.mxu0 0.0
    %100 = vmatprep.subr.mxu0 0.0
    %101 = vmatpush1.msra.mxu0 0.0
    %102 = vmatprep.subr.mxu0 0.0
    %103 = vmatpush1.msra.mxu0 0.0
    %104 = vmatprep.subr.mxu0 0.0
    %105 = vmatpush1.msra.mxu0 0.0
    %106 = vmatprep.subr.mxu0 0.0
    %107 = vmatpush1.msra.mxu0 0.0
    %108 = vmatprep.subr.mxu0 0.0
    %109 = vmatpush1.msra.mxu0 0.0
    %110 = vmatprep.subr.mxu0 0.0
    %111 = vmatpush1.msra.mxu0 0.0
    %112 = vmatprep.subr.mxu0 0.0
    %113 = vmatpush1.msra.mxu0 0.0
    %114 = vmatprep.mubr.f32.mxu0 0.0
    %115 = vmatmul.mubr.f32.gmra.mrb[0].mxu0 %v48
    %v116 = vpop.f32.mrb[0].mxu0
    %v117 = vadd.f32 0.0, %v116
    %v118 = vpop.f32.mrb[0].mxu0
    %119 = vdwg.mxu0
    %v120 = vld [vmem:[%s2] sm:$0x1]
    %v122 = vlaneseq
    %v123 = vshrl.u32 %v122, 7
    %v124 = vsub.s32 0, %v123
    %v125 = vrot.slane %v120, %v124
    %v127 = vadd.f32 %v117, %v125
    %vm128 = vcmask 9216
    %129 = vst.msk [vmem:[#allocation7] sm:$0x3] %vm128, %v127
    // Predicated region
    $region22: #{tpu_custom_call.1} parent=1 // pred_check
      _
    $region23: #{tpu_custom_call.1} parent=1 // pred_check_branch
      %131 = sbr.rel (0) target = $region25
    $region24: #{tpu_custom_call.1} parent=1 // pred_region
      %s133 = ssub.s32 32, 32
      %134 = vsyncadd [#allocation4], %s133
      %s136 = sshll.u32 [#allocation7], 4
      %s137 = int_to_ptr.vmem [resolvable:$true] %s136
      %139 = dma.vmem_to_hbm [thread:$0]  %s137, 32, %s3, [#allocation4]
    $region25: #{tpu_custom_call.1} parent=1 // pred_fallthru
      _
    // Predicated region
    $region26: #{tpu_custom_call.1} parent=1 // pred_check
      _
    $region27: #{tpu_custom_call.1} parent=1 // pred_check_branch
      %141 = sbr.rel (0) target = $region29
    $region28: #{tpu_custom_call.1} parent=1 // pred_region
      %142 = dma.done [#allocation4], 32
    $region29: #{tpu_custom_call.1} parent=1 // pred_fallthru
      _
    %143 = vsyncpa [#allocation3], 1
    %144 = vsyncpa [#allocation6], 1
    %145 = vsyncpa [#allocation4], 1

// kernel: tpu_custom_call.1
$region0: #{tpu_custom_call.1}
  #allocation0 [shape = 'u32[]', space=smem, size = 0x4, offset = 0x4, fixed_abs, tag = 'smem constant byte address 0x4 - core index']
  #allocation1 [shape = 'u32[144,128]{1,0:T(1,128)}', space=vmem, size = 0x12000, scoped, tag = 'internal scratch']
  %s0 = inlined_call_operand.hbm [shape: f32[2,32], index: 0, kind: input, shape index: {}]
  %s1 = inlined_call_operand.hbm [shape: f32[32,128], index: 1, kind: input, shape index: {}]
  %s2 = inlined_call_operand.vmem [shape: f32[1,2], index: 2, kind: input, shape index: {}]
  %s3 = inlined_call_operand.hbm [shape: f32[2,2], index: 3, kind: output, shape index: {}]
  %s4 = sld [smem:[#allocation0]]
  $region30: #{tpu_custom_call.1} parent=0
    _
  %s6 = ssub.s32 1, %s4
  %s7 = scalar_select 0, %s6, %s4
  $region1: #{tpu_custom_call.1} parent=0
    #allocation2 [shape = 'u8[1024]{0}', space=vmem, size = 0x400, scoped, tag = 'input window, operand 0, single buffered']
    #allocation3 [shape = 's32[1]{0}', space=sflag, size = 0x4, scoped, tag = 'scoped memory for tpu_custom_call.1']
    #allocation4 [shape = 's32[1]{0}', space=sflag, size = 0x4, scoped, tag = 'scoped memory for tpu_custom_call.1']
    #allocation5 [shape = 'u8[16384]{0}', space=vmem, size = 0x4000, scoped, tag = 'input window, operand 1, single buffered']
    #allocation6 [shape = 's32[1]{0}', space=sflag, size = 0x4, scoped, tag = 'scoped memory for tpu_custom_call.1']
    #allocation7 [shape = 'u8[1024]{0}', space=vmem, size = 0x400, scoped, tag = 'output window, operand 0, single buffered']
    %8 = vsyncpa [#allocation3], 0
    %9 = vsyncpa [#allocation6], 0
    %10 = vsyncpa [#allocation4], 0
    // Predicated region
    $region2: #{tpu_custom_call.1} parent=1 // pred_check
      _
    $region3: #{tpu_custom_call.1} parent=1 // pred_check_branch
      %12 = sbr.rel (0) target = $region5
    $region4: #{tpu_custom_call.1} parent=1 // pred_region
      %s14 = ssub.s32 32, 32
      %15 = vsyncadd [#allocation3], %s14
      %s17 = sshll.u32 [#allocation2], 4
      %s18 = int_to_ptr.vmem [resolvable:$true] %s17
      %20 = dma.hbm_to_vmem [thread:$0]  %s0, 32, %s18, [#allocation3]
    $region5: #{tpu_custom_call.1} parent=1 // pred_fallthru
      _
    // Predicated region
    $region6: #{tpu_custom_call.1} parent=1 // pred_check
      _
    $region7: #{tpu_custom_call.1} parent=1 // pred_check_branch
      %22 = sbr.rel (0) target = $region9
    $region8: #{tpu_custom_call.1} parent=1 // pred_region
      %s24 = ssub.s32 512, 512
      %25 = vsyncadd [#allocation6], %s24
      %s26 = sshll.u32 [#allocation5], 4
      %s27 = int_to_ptr.vmem [resolvable:$true] %s26
      %32 = dma.hbm_to_vmem [thread:$0]  %s1, 512, %s27, [#allocation6], 128, 128, 8
    $region9: #{tpu_custom_call.1} parent=1 // pred_fallthru
      _
    // Predicated region
    $region10: #{tpu_custom_call.1} parent=1 // pred_check
      _
    $region11: #{tpu_custom_call.1} parent=1 // pred_check_branch
      %34 = sbr.rel (0) target = $region13
    $region12: #{tpu_custom_call.1} parent=1 // pred_region
      _
    $region13: #{tpu_custom_call.1} parent=1 // pred_fallthru
      _
    // Predicated region
    $region14: #{tpu_custom_call.1} parent=1 // pred_check
      _
    $region15: #{tpu_custom_call.1} parent=1 // pred_check_branch
      %36 = sbr.rel (0) target = $region17
    $region16: #{tpu_custom_call.1} parent=1 // pred_region
      %37 = dma.done [#allocation3], 32
    $region17: #{tpu_custom_call.1} parent=1 // pred_fallthru
      _
    // Predicated region
    $region18: #{tpu_custom_call.1} parent=1 // pred_check
      _
    $region19: #{tpu_custom_call.1} parent=1 // pred_check_branch
      %39 = sbr.rel (0) target = $region21
    $region20: #{tpu_custom_call.1} parent=1 // pred_region
      %40 = dma.done [#allocation6], 512
    $region21: #{tpu_custom_call.1} parent=1 // pred_fallthru
      _
    %v41 = vld [vmem:[#allocation2] sm:$0x3]
    %v42 = vld [vmem:[#allocation5] sm:$0xff]
    %v43 = vld [vmem:[#allocation5 + $0x8] sm:$0xff]
    %v44 = vld [vmem:[#allocation5 + $0x10] sm:$0xff]
    %v45 = vld [vmem:[#allocation5 + $0x18] sm:$0xff]
    %vm46 = vcmask 261120
    %v48 = vsel %vm46, %v41, 0
    %50 = vmatprep.subr.mxu0 0.0
    %51 = vmatpush1.msra.mxu0 %v42
    %52 = vmatprep.subr.mxu0 0.0
    %53 = vmatpush1.msra.mxu0 %v43
    %54 = vmatprep.subr.mxu0 0.0
    %55 = vmatpush1.msra.mxu0 %v44
    %56 = vmatprep.subr.mxu0 0.0
    %57 = vmatpush1.msra.mxu0 %v45
    %58 = vmatprep.subr.mxu0 0.0
    %59 = vmatpush1.msra.mxu0 0.0
    %60 = vmatprep.subr.mxu0 0.0
    %61 = vmatpush1.msra.mxu0 0.0
    %62 = vmatprep.subr.mxu0 0.0
    %63 = vmatpush1.msra.mxu0 0.0
    %64 = vmatprep.subr.mxu0 0.0
    %65 = vmatpush1.msra.mxu0 0.0
    %66 = vmatprep.subr.mxu0 0.0
    %67 = vmatpush1.msra.mxu0 0.0
    %68 = vmatprep.subr.mxu0 0.0
    %69 = vmatpush1.msra.mxu0 0.0
    %70 = vmatprep.subr.mxu0 0.0
    %71 = vmatpush1.msra.mxu0 0.0
    %72 = vmatprep.subr.mxu0 0.0
    %73 = vmatpush1.msra.mxu0 0.0
    %74 = vmatprep.subr.mxu0 0.0
    %75 = vmatpush1.msra.mxu0 0.0
    %76 = vmatprep.subr.mxu0 0.0
    %77 = vmatpush1.msra.mxu0 0.0
    %78 = vmatprep.subr.mxu0 0.0
    %79 = vmatpush1.msra.mxu0 0.0
    %80 = vmatprep.subr.mxu0 0.0
    %81 = vmatpush1.msra.mxu0 0.0
    %82 = vmatprep.subr.mxu0 0.0
    %83 = vmatpush1.msra.mxu0 0.0
    %84 = vmatprep.subr.mxu0 0.0
    %85 = vmatpush1.msra.mxu0 0.0
    %86 = vmatprep.subr.mxu0 0.0
    %87 = vmatpush1.msra.mxu0 0.0
    %88 = vmatprep.subr.mxu0 0.0
    %89 = vmatpush1.msra.mxu0 0.0
    %90 = vmatprep.subr.mxu0 0.0
    %91 = vmatpush1.msra.mxu0 0.0
    %92 = vmatprep.subr.mxu0 0.0
    %93 = vmatpush1.msra.mxu0 0.0
    %94 = vmatprep.subr.mxu0 0.0
    %95 = vmatpush1.msra.mxu0 0.0
    %96 = vmatprep.subr.mxu0 0.0
    %97 = vmatpush1.msra.mxu0 0.0
    %98 = vmatprep.subr.mxu0 0.0
    %99 = vmatpush1.msra.mxu0 0.0
    %100 = vmatprep.subr.mxu0 0.0
    %101 = vmatpush1.msra.mxu0 0.0
    %102 = vmatprep.subr.mxu0 0.0
    %103 = vmatpush1.msra.mxu0 0.0
    %104 = vmatprep.subr.mxu0 0.0
    %105 = vmatpush1.msra.mxu0 0.0
    %106 = vmatprep.subr.mxu0 0.0
    %107 = vmatpush1.msra.mxu0 0.0
    %108 = vmatprep.subr.mxu0 0.0
    %109 = vmatpush1.msra.mxu0 0.0
    %110 = vmatprep.subr.mxu0 0.0
    %111 = vmatpush1.msra.mxu0 0.0
    %112 = vmatprep.subr.mxu0 0.0
    %113 = vmatpush1.msra.mxu0 0.0
    %114 = vmatprep.mubr.f32.mxu0 0.0
    %115 = vmatmul.mubr.f32.gmra.mrb[0].mxu0 %v48
    %v116 = vpop.f32.mrb[0].mxu0
    %v117 = vadd.f32 0.0, %v116
    %v118 = vpop.f32.mrb[0].mxu0
    %119 = vdwg.mxu0
    %v120 = vld [vmem:[%s2] sm:$0x1]
    %v122 = vlaneseq
    %v123 = vshrl.u32 %v122, 7
    %v124 = vsub.s32 0, %v123
    %v125 = vrot.slane %v120, %v124
    %v127 = vadd.f32 %v117, %v125
    %vm128 = vcmask 9216
    %129 = vst.msk [vmem:[#allocation7] sm:$0x3] %vm128, %v127
    // Predicated region
    $region22: #{tpu_custom_call.1} parent=1 // pred_check
      _
    $region23: #{tpu_custom_call.1} parent=1 // pred_check_branch
      %131 = sbr.rel (0) target = $region25
    $region24: #{tpu_custom_call.1} parent=1 // pred_region
      %s133 = ssub.s32 32, 32
      %134 = vsyncadd [#allocation4], %s133
      %s136 = sshll.u32 [#allocation7], 4
      %s137 = int_to_ptr.vmem [resolvable:$true] %s136
      %139 = dma.vmem_to_hbm [thread:$0]  %s137, 32, %s3, [#allocation4]
    $region25: #{tpu_custom_call.1} parent=1 // pred_fallthru
      _
    // Predicated region
    $region26: #{tpu_custom_call.1} parent=1 // pred_check
      _
    $region27: #{tpu_custom_call.1} parent=1 // pred_check_branch
      %141 = sbr.rel (0) target = $region29
    $region28: #{tpu_custom_call.1} parent=1 // pred_region
      %142 = dma.done [#allocation4], 32
    $region29: #{tpu_custom_call.1} parent=1 // pred_fallthru
      _
    %143 = vsyncpa [#allocation3], 1
    %144 = vsyncpa [#allocation6], 1
    %145 = vsyncpa [#allocation4], 1

</llo_original>
